<compile_context>
chip_gen: v7x
topology: tpu7x:2x2x1
jax: 0.10.0
libtpu: 0.0.40
codegen_flags: <defaults>
</compile_context>

<pallas_src>
import jax
import jax.numpy as jnp
from jax import lax
from jax.experimental import pallas as pl
from jax.experimental.pallas import tpu as pltpu


def _vmem_capacity_bytes():
    """Physical VMEM per TensorCore; conservative (v7x-sized) fallback."""
    try:
        info = pltpu.get_tpu_info()
        cap = getattr(info, "vmem_capacity_bytes", None)
        if cap:
            return int(cap)
    except Exception:
        pass
    return 64 * 1024 * 1024


def _round_up(a, m):
    return ((a + m - 1) // m) * m


def _make_std_loss_kernel(C, W_seg, K, oh, ow, Np, TB):
    """Build kernel with static config baked in (masks only emitted if needed)."""
    use_lane_mask = K > 1              # seams between lane-packed image segments
    use_batch_mask = (Np % TB) != 0    # partial last batch block

    def kernel(x_ref, out_ref):
        # x_ref: (TB, C, H, Wp) block;  out_ref: (1, 1, OWp) per-lane partial sums.
        _, _, H, Wp = x_ref.shape
        OWp = Wp - 4

        # Unscaled grayscale: sum over channel planes (one f32 plane live).
        # The 1/C factor is folded into the wrapper's final division.
        g = x_ref[:, 0].astype(jnp.float32)
        for c in range(1, C):
            g = g + x_ref[:, c].astype(jnp.float32)

        # conv2d(gray, delta_5x5) == center crop (valid conv).
        center = g[:, 2:2 + oh, 2:2 + OWp]                  # (TB, oh, OWp)

        # conv2d(gray, ones_5x5/25) == separable 5x5 box blur: 4 lane-shifted
        # adds + 4 sublane-shifted adds.
        hs = g[:, :, 0:OWp]
        for dj in range(1, 5):
            hs = hs + g[:, :, dj:dj + OWp]                  # (TB, H, OWp)
        blur = hs[:, 0:oh, :]
        for di in range(1, 5):
            blur = blur + hs[:, di:di + oh, :]              # (TB, oh, OWp)

        diff = center - blur * jnp.float32(1.0 / 25.0)
        d2 = diff * diff                                    # (TB, oh, OWp)

        # Mask (a) seam columns whose 5x5 window would cross a packed-image
        # boundary and (b) garbage tail rows of a partial last batch block.
        mask = None
        if use_lane_mask:
            col = lax.broadcasted_iota(jnp.int32, (1, 1, OWp), 2)
            mask = (col % W_seg) < ow
        if use_batch_mask:
            row = lax.broadcasted_iota(jnp.int32, (TB, 1, 1), 0)
            bmask = row < (Np - pl.program_id(0) * TB)
            mask = bmask if mask is None else jnp.logical_and(mask, bmask)
        if mask is not None:
            d2 = jnp.where(mask, d2, jnp.float32(0.0))

        # Reduce batch + rows, keep the lane axis; each grid step owns a
        # disjoint output block (race-free with "parallel" semantics).  The
        # final cross-lane / cross-block reduction happens in the wrapper.
        partial = jnp.sum(d2, axis=0)                       # (oh, OWp)
        partial = jnp.sum(partial, axis=0)                  # (OWp,)
        out_ref[...] = partial.reshape(1, 1, OWp)

    return kernel


def std_loss(x):
    """x: (N, C, H, W). Returns scalar f32 loss matching PyTorch StdLoss.forward."""
    N, C, H, W = x.shape
    assert H > 4 and W > 4, "need spatial dims > 4 for a valid 5x5 conv"
    oh, ow = H - 4, W - 4
    itemsize = jnp.dtype(x.dtype).itemsize

    # ---- Lane packing for narrow images (W < 128): K images side-by-side
    # along the lane axis.  Zero-padded tail images contribute exactly 0.
    K = max(1, 128 // W)
    K = min(K, N)
    if K > 1:
        Np = pl.cdiv(N, K)
        pad_n = Np * K - N
        xp = jnp.pad(x, ((0, pad_n), (0, 0), (0, 0), (0, 0))) if pad_n else x
        xp = (xp.reshape(Np, K, C, H, W)
                .transpose(0, 2, 3, 1, 4)
                .reshape(Np, C, H, K * W))
    else:
        K, Np, xp = 1, N, x
    Wp = K * W
    OWp = Wp - 4

    # ---- VMEM budgeting from the real on-chip (lane/sublane padded) footprint.
    sub_in = max(8, 32 // itemsize)                          # 8 f32 / 16 bf16 / 32 int8
    in_bytes = C * _round_up(H, sub_in) * _round_up(Wp, 128) * itemsize
    f32_plane = _round_up(H, 8) * _round_up(Wp, 128) * 4
    per_elem = 2 * in_bytes + 5 * f32_plane                  # 2x double-buffered input + intermediates

    vmem_cap = _vmem_capacity_bytes()                        # 64 MiB v7x, 128 MiB v5e/v6e
    vmem_limit = min(vmem_cap * 3 // 4, vmem_cap - (8 << 20))  # 48 MiB / 96 MiB
    usable = vmem_limit - (2 << 20)                          # headroom: outputs + internal scratch

    # ---- Tile selection: biggest tile that fits; >= 2 blocks for v7x megacore;
    # cdiv-balanced blocks (no divisor-collapse to tb=1 for awkward N).
    tb = int(max(1, min(Np, usable // per_elem)))
    if Np >= 2:
        tb = min(tb, pl.cdiv(Np, 2))
    nb = pl.cdiv(Np, tb)
    tb = pl.cdiv(Np, nb)
    nb = pl.cdiv(Np, tb)

    kernel = _make_std_loss_kernel(C, W, K, oh, ow, Np, tb)

    out = pl.pallas_call(
        kernel,
        out_shape=jax.ShapeDtypeStruct((nb, 1, OWp), jnp.float32),
        grid_spec=pltpu.PrefetchScalarGridSpec(
            num_scalar_prefetch=0,
            grid=(nb,),
            in_specs=[pl.BlockSpec((tb, C, H, Wp), lambda b: (b, 0, 0, 0))],
            out_specs=pl.BlockSpec((1, 1, OWp), lambda b: (b, 0, 0)),
        ),
        compiler_params=pltpu.CompilerParams(
            dimension_semantics=("parallel",),
            vmem_limit_bytes=int(vmem_limit),
        ),
    )(xp)

    # Final cross-lane / cross-block reduction; C^2 factor from the folded 1/C.
    return jnp.sum(out) / jnp.float32(C * C * N * oh * ow)


def _std_loss_ref(x):
    """Pure-JAX reference mirroring the PyTorch forward."""
    gray = jnp.mean(x.astype(jnp.float32), axis=1)           # (N, H, W)
    H, W = gray.shape[1], gray.shape[2]
    oh, ow = H - 4, W - 4
    center = gray[:, 2:2 + oh, 2:2 + ow]
    blur = jnp.zeros_like(center)
    for di in range(5):
        for dj in range(5):
            blur = blur + gray[:, di:di + oh, dj:dj + ow]
    blur = blur / 25.0
    return jnp.mean((center - blur) ** 2)


if __name__ == "__main__":
    key = jax.random.PRNGKey(0)

    cases = [
        (2, 4, 16, 16),    # module-implied shape: small W -> lane-packing path (K=2)
        (3, 3, 24, 136),   # W >= 128: no packing; partial last batch block (tail mask)
        (5, 3, 12, 40),    # packing (K=3) with a zero-padded tail image
    ]
    for i, shape in enumerate(cases):
        k = jax.random.fold_in(key, i)
        x = jax.random.normal(k, shape, dtype=jnp.float32)   # NCHW
        got = std_loss(x)
        jax.block_until_ready(got)
        want = _std_loss_ref(x)
        assert jnp.allclose(got, want, rtol=3e-5, atol=1e-6), (shape, got, want)

    print("KERNEL_OK")
</pallas_src>

<mosaic_0001>
module attributes {stable_mosaic.version = 11 : i64} {
  func.func @kernel(%arg0: i32, %arg1: memref<1x4x16x32xf32, #tpu.memory_space<vmem>>, %arg2: memref<1x1x28xf32, #tpu.memory_space<vmem>>) attributes {dimension_semantics = [#tpu.dimension_semantics<parallel>], iteration_bounds = array<i64: 1>, scalar_prefetch = 0 : i64, scratch_operands = 0 : i64, tpu.core_type = #tpu.core_type<tc>, window_params = [{transform_indices = @transform_0, window_bounds = array<i64: 1, 4, 16, 32>}, {transform_indices = @transform_1, window_bounds = array<i64: 1, 1, 28>}]} {
    %c0 = arith.constant 0 : index
    %c0_0 = arith.constant 0 : index
    %c0_1 = arith.constant 0 : index
    %c0_2 = arith.constant 0 : index
    %0 = vector.load %arg1[%c0, %c0_0, %c0_1, %c0_2] : memref<1x4x16x32xf32, #tpu.memory_space<vmem>>, vector<1x1x16x32xf32>
    %1 = vector.shape_cast %0 : vector<1x1x16x32xf32> to vector<1x16x32xf32>
    %c0_3 = arith.constant 0 : index
    %c1 = arith.constant 1 : index
    %c0_4 = arith.constant 0 : index
    %c0_5 = arith.constant 0 : index
    %2 = vector.load %arg1[%c0_3, %c1, %c0_4, %c0_5] : memref<1x4x16x32xf32, #tpu.memory_space<vmem>>, vector<1x1x16x32xf32>
    %3 = vector.shape_cast %2 : vector<1x1x16x32xf32> to vector<1x16x32xf32>
    %4 = arith.addf %1, %3 : vector<1x16x32xf32>
    %c0_6 = arith.constant 0 : index
    %c2 = arith.constant 2 : index
    %c0_7 = arith.constant 0 : index
    %c0_8 = arith.constant 0 : index
    %5 = vector.load %arg1[%c0_6, %c2, %c0_7, %c0_8] : memref<1x4x16x32xf32, #tpu.memory_space<vmem>>, vector<1x1x16x32xf32>
    %6 = vector.shape_cast %5 : vector<1x1x16x32xf32> to vector<1x16x32xf32>
    %7 = arith.addf %4, %6 : vector<1x16x32xf32>
    %c0_9 = arith.constant 0 : index
    %c3 = arith.constant 3 : index
    %c0_10 = arith.constant 0 : index
    %c0_11 = arith.constant 0 : index
    %8 = vector.load %arg1[%c0_9, %c3, %c0_10, %c0_11] : memref<1x4x16x32xf32, #tpu.memory_space<vmem>>, vector<1x1x16x32xf32>
    %9 = vector.shape_cast %8 : vector<1x1x16x32xf32> to vector<1x16x32xf32>
    %10 = arith.addf %7, %9 : vector<1x16x32xf32>
    %11 = vector.extract_strided_slice %10 {offsets = [0, 2, 2], sizes = [1, 12, 28], strides = [1, 1, 1]} : vector<1x16x32xf32> to vector<1x12x28xf32>
    %12 = vector.extract_strided_slice %10 {offsets = [0, 0, 0], sizes = [1, 16, 28], strides = [1, 1, 1]} : vector<1x16x32xf32> to vector<1x16x28xf32>
    %13 = vector.extract_strided_slice %10 {offsets = [0, 0, 1], sizes = [1, 16, 28], strides = [1, 1, 1]} : vector<1x16x32xf32> to vector<1x16x28xf32>
    %14 = arith.addf %12, %13 : vector<1x16x28xf32>
    %15 = vector.extract_strided_slice %10 {offsets = [0, 0, 2], sizes = [1, 16, 28], strides = [1, 1, 1]} : vector<1x16x32xf32> to vector<1x16x28xf32>
    %16 = arith.addf %14, %15 : vector<1x16x28xf32>
    %17 = vector.extract_strided_slice %10 {offsets = [0, 0, 3], sizes = [1, 16, 28], strides = [1, 1, 1]} : vector<1x16x32xf32> to vector<1x16x28xf32>
    %18 = arith.addf %16, %17 : vector<1x16x28xf32>
    %19 = vector.extract_strided_slice %10 {offsets = [0, 0, 4], sizes = [1, 16, 28], strides = [1, 1, 1]} : vector<1x16x32xf32> to vector<1x16x28xf32>
    %20 = arith.addf %18, %19 : vector<1x16x28xf32>
    %21 = vector.extract_strided_slice %20 {offsets = [0, 0, 0], sizes = [1, 12, 28], strides = [1, 1, 1]} : vector<1x16x28xf32> to vector<1x12x28xf32>
    %22 = vector.extract_strided_slice %20 {offsets = [0, 1, 0], sizes = [1, 12, 28], strides = [1, 1, 1]} : vector<1x16x28xf32> to vector<1x12x28xf32>
    %23 = arith.addf %21, %22 : vector<1x12x28xf32>
    %24 = vector.extract_strided_slice %20 {offsets = [0, 2, 0], sizes = [1, 12, 28], strides = [1, 1, 1]} : vector<1x16x28xf32> to vector<1x12x28xf32>
    %25 = arith.addf %23, %24 : vector<1x12x28xf32>
    %26 = vector.extract_strided_slice %20 {offsets = [0, 3, 0], sizes = [1, 12, 28], strides = [1, 1, 1]} : vector<1x16x28xf32> to vector<1x12x28xf32>
    %27 = arith.addf %25, %26 : vector<1x12x28xf32>
    %28 = vector.extract_strided_slice %20 {offsets = [0, 4, 0], sizes = [1, 12, 28], strides = [1, 1, 1]} : vector<1x16x28xf32> to vector<1x12x28xf32>
    %29 = arith.addf %27, %28 : vector<1x12x28xf32>
    %cst = arith.constant 4.000000e-02 : f32
    %30 = vector.broadcast %cst : f32 to vector<1x12x28xf32>
    %31 = arith.mulf %29, %30 : vector<1x12x28xf32>
    %32 = arith.subf %11, %31 : vector<1x12x28xf32>
    %33 = arith.mulf %32, %32 : vector<1x12x28xf32>
    %34 = tpu.iota {dimensions = array<i32: 2>} : vector<1x1x28xi32>
    %c16_i32 = arith.constant 16 : i32
    %c0_i32 = arith.constant 0 : i32
    %35 = arith.cmpi eq, %c16_i32, %c0_i32 : i32
    %c1_i32 = arith.constant 1 : i32
    %36 = arith.select %35, %c1_i32, %c16_i32 : i32
    %37 = vector.broadcast %36 : i32 to vector<1x1x28xi32>
    %38 = arith.remsi %34, %37 : vector<1x1x28xi32>
    %c0_i32_12 = arith.constant 0 : i32
    %39 = vector.broadcast %c0_i32_12 : i32 to vector<1x1x28xi32>
    %40 = arith.cmpi ne, %38, %39 : vector<1x1x28xi32>
    %c0_i32_13 = arith.constant 0 : i32
    %41 = vector.broadcast %c0_i32_13 : i32 to vector<1x1x28xi32>
    %42 = arith.cmpi slt, %38, %41 : vector<1x1x28xi32>
    %c0_i32_14 = arith.constant 0 : i32
    %43 = arith.cmpi slt, %36, %c0_i32_14 : i32
    %44 = vector.broadcast %43 : i1 to vector<1x1x28xi1>
    %45 = vector.broadcast %44 : vector<1x1x28xi1> to vector<1x1x28xi1>
    %46 = arith.xori %42, %45 : vector<1x1x28xi1>
    %47 = arith.andi %46, %40 : vector<1x1x28xi1>
    %48 = vector.broadcast %36 : i32 to vector<1x1x28xi32>
    %49 = arith.addi %38, %48 : vector<1x1x28xi32>
    %50 = arith.select %47, %49, %38 : vector<1x1x28xi1>, vector<1x1x28xi32>
    %c12_i32 = arith.constant 12 : i32
    %51 = vector.broadcast %c12_i32 : i32 to vector<1x1x28xi32>
    %52 = arith.cmpi slt, %50, %51 : vector<1x1x28xi32>
    %cst_15 = arith.constant 0.000000e+00 : f32
    %53 = vector.shape_cast %52 : vector<1x1x28xi1> to vector<1x1x28xi1>
    %54 = vector.broadcast %53 : vector<1x1x28xi1> to vector<1x12x28xi1>
    %55 = vector.broadcast %cst_15 : f32 to vector<1x12x28xf32>
    %56 = arith.select %54, %33, %55 : vector<1x12x28xi1>, vector<1x12x28xf32>
    %cst_16 = arith.constant dense<0.000000e+00> : vector<12x28xf32>
    %57 = vector.multi_reduction <add>, %56, %cst_16 [0] : vector<1x12x28xf32> to vector<12x28xf32>
    %cst_17 = arith.constant dense<0.000000e+00> : vector<28xf32>
    %58 = vector.multi_reduction <add>, %57, %cst_17 [0] : vector<12x28xf32> to vector<28xf32>
    %59 = vector.shape_cast %58 : vector<28xf32> to vector<1x1x28xf32>
    %c0_18 = arith.constant 0 : index
    %c0_19 = arith.constant 0 : index
    %c0_20 = arith.constant 0 : index
    %60 = vector.load %arg2[%c0_18, %c0_19, %c0_20] : memref<1x1x28xf32, #tpu.memory_space<vmem>>, vector<1x1x28xf32>
    tpu.vector_store %arg2[%c0_18, %c0_19, %c0_20], %59 {strides = array<i32>} : memref<1x1x28xf32, #tpu.memory_space<vmem>>, vector<1x1x28xf32>,
    return
  }
  func.func @transform_0(%arg0: i32) -> (i32, i32, i32, i32) {
    %c0_i32 = arith.constant 0 : i32
    %c0_i32_0 = arith.constant 0 : i32
    %c0_i32_1 = arith.constant 0 : i32
    %c0_i32_2 = arith.constant 0 : i32
    return %arg0, %c0_i32, %c0_i32_0, %c0_i32_1 : i32, i32, i32, i32
  }
  func.func @transform_1(%arg0: i32) -> (i32, i32, i32) {
    %c0_i32 = arith.constant 0 : i32
    %c0_i32_0 = arith.constant 0 : i32
    %c0_i32_1 = arith.constant 0 : i32
    return %arg0, %c0_i32, %c0_i32_0 : i32, i32, i32
  }
}

</mosaic_0001>

<llo_original>
// kernel: tpu_custom_call.1
$region0: #{tpu_custom_call.1}
  #allocation0 [shape = 'u32[]', space=smem, size = 0x4, offset = 0x4, fixed_abs, tag = 'smem constant byte address 0x4 - core index']
  #allocation1 [shape = 'u32[144,128]{1,0:T(1,128)}', space=vmem, size = 0x12000, scoped, tag = 'internal scratch']
  %s0 = inlined_call_operand.hbm [shape: f32[1,4,16,32], index: 0, kind: input, shape index: {}]
  %s1 = inlined_call_operand.hbm [shape: f32[1,1,28], index: 1, kind: output, shape index: {}]
  %s2 = sld [smem:[#allocation0]]
  $region18: #{tpu_custom_call.1} parent=0
    _
  %s4 = ssub.s32 1, %s2
  %s5 = scalar_select 0, %s4, %s2
  $region1: #{tpu_custom_call.1} parent=0
    #allocation2 [shape = 'u8[32768]{0}', space=vmem, size = 0x8000, scoped, tag = 'input window, operand 0, single buffered']
    #allocation3 [shape = 's32[1]{0}', space=sflag, size = 0x4, scoped, tag = 'scoped memory for tpu_custom_call.1']
    #allocation4 [shape = 's32[1]{0}', space=sflag, size = 0x4, scoped, tag = 'scoped memory for tpu_custom_call.1']
    #allocation5 [shape = 'u8[512]{0}', space=vmem, size = 0x400, scoped, tag = 'output window, operand 0, single buffered']
    %6 = vsyncpa [#allocation3], 0
    %7 = vsyncpa [#allocation4], 0
    // Predicated region
    $region2: #{tpu_custom_call.1} parent=1 // pred_check
      _
    $region3: #{tpu_custom_call.1} parent=1 // pred_check_branch
      %9 = sbr.rel (0) target = $region5
    $region4: #{tpu_custom_call.1} parent=1 // pred_region
      %s11 = ssub.s32 1024, 1024
      %12 = vsyncadd [#allocation3], %s11
      %s13 = sshll.u32 [#allocation2], 4
      %s14 = int_to_ptr.vmem [resolvable:$true] %s13
      %19 = dma.hbm_to_vmem [thread:$0]  %s0, 1024, %s14, [#allocation3], 128, 128, 8
    $region5: #{tpu_custom_call.1} parent=1 // pred_fallthru
      _
    // Predicated region
    $region6: #{tpu_custom_call.1} parent=1 // pred_check
      _
    $region7: #{tpu_custom_call.1} parent=1 // pred_check_branch
      %21 = sbr.rel (0) target = $region9
    $region8: #{tpu_custom_call.1} parent=1 // pred_region
      %22 = dma.done [#allocation3], 1024
    $region9: #{tpu_custom_call.1} parent=1 // pred_fallthru
      _
    %v23 = vld [vmem:[#allocation2] sm:$0xff]
    %v24 = vld [vmem:[#allocation2 + $0x8] sm:$0xff]
    %s25 = scalar_lea.vmem [#allocation2], 16
    %v26 = vld [vmem:[%s25] sm:$0xff]
    %v27 = vld [vmem:[%s25 + $0x8] sm:$0xff]
    %v28 = vadd.f32 %v23, %v26
    %v29 = vadd.f32 %v24, %v27
    %s30 = scalar_lea.vmem [#allocation2], 32
    %v31 = vld [vmem:[%s30] sm:$0xff]
    %v32 = vld [vmem:[%s30 + $0x8] sm:$0xff]
    %v33 = vadd.f32 %v28, %v31
    %v34 = vadd.f32 %v29, %v32
    %s35 = scalar_lea.vmem [#allocation2], 48
    %v36 = vld [vmem:[%s35] sm:$0xff]
    %v37 = vld [vmem:[%s35 + $0x8] sm:$0xff]
    %v38 = vadd.f32 %v33, %v36
    %v39 = vadd.f32 %v34, %v37
    %42 = vrot.lane.b32.xlu0 %v38, 127
    %v43 = vpop.permute.xlu0 %42
    %44 = vrot.lane.b32.xlu0 %v39, 127
    %v45 = vpop.permute.xlu0 %44
    %v48 = vadd.f32 %v38, %v43
    %v49 = vadd.f32 %v39, %v45
    %50 = vrot.lane.b32.xlu0 %v38, 126
    %v51 = vpop.permute.xlu0 %50
    %52 = vrot.lane.b32.xlu0 %v39, 126
    %v53 = vpop.permute.xlu0 %52
    %v56 = vadd.f32 %v48, %v51
    %v57 = vadd.f32 %v49, %v53
    %58 = vrot.lane.b32.xlu0 %v38, 125
    %v59 = vpop.permute.xlu0 %58
    %60 = vrot.lane.b32.xlu0 %v39, 125
    %v61 = vpop.permute.xlu0 %60
    %v64 = vadd.f32 %v56, %v59
    %v65 = vadd.f32 %v57, %v61
    %66 = vrot.lane.b32.xlu0 %v38, 124
    %v67 = vpop.permute.xlu0 %66
    %68 = vrot.lane.b32.xlu0 %v39, 124
    %v69 = vpop.permute.xlu0 %68
    %v72 = vadd.f32 %v64, %v67
    %v73 = vadd.f32 %v65, %v69
    %vm76 = vcmask 1046528
    %v77 = vrot.slane %v72, 1
    %v78 = vrot.slane %v73, 1
    %v79 = vsel %vm76, %v77, %v78
    %v82 = vadd.f32 %v72, %v79
    %v83 = vadd.f32 %v73, %v78
    %vm84 = vcmask 1045504
    %v85 = vrot.slane %v72, 2
    %v86 = vrot.slane %v73, 2
    %v87 = vsel %vm84, %v85, %v86
    %v90 = vadd.f32 %v82, %v87
    %v91 = vadd.f32 %v83, %v86
    %vm92 = vcmask 1044480
    %v93 = vrot.slane %v72, 3
    %v94 = vrot.slane %v73, 3
    %v95 = vsel %vm92, %v93, %v94
    %v98 = vadd.f32 %v90, %v95
    %v99 = vadd.f32 %v91, %v94
    %vm100 = vcmask 1043456
    %v101 = vrot.slane %v72, 4
    %v102 = vrot.slane %v73, 4
    %v103 = vsel %vm100, %v101, %v102
    %v106 = vadd.f32 %v98, %v103
    %v107 = vadd.f32 %v99, %v102
    %v108 = vmul.f32 %v106, 0.04
    %v109 = vmul.f32 %v107, 0.04
    %vm112 = vcmask 1041408
    %v113 = vrot.slane %v108, 6
    %v114 = vrot.slane %v109, 6
    %v115 = vsel %vm112, %v113, %v114
    %116 = vrot.lane.b32.xlu0 %v113, 2
    %v117 = vpop.permute.xlu0 %116
    %118 = vrot.lane.b32.xlu0 %v115, 2
    %v119 = vpop.permute.xlu0 %118
    %v122 = vsub.f32 %v38, %v117
    %v123 = vsub.f32 %v39, %v119
    %v124 = vmul.f32 %v122, %v122
    %v125 = vmul.f32 %v123, %v123
    %v126 = vlaneseq
    %v127 = vand.u32 %v126, 127
    %vm128 = vcmp.lt.s32.totalorder %v127, 0
    %v129 = vsub.s32 0, %v127
    %v130 = vsel %vm128, %v129, %v127
    %v131 = vshrl.u32 %v130, 4
    %v132 = vand.u32 %v130, 15
    %v133 = vsub.s32 0, %v132
    %v134 = vsel %vm128, %v133, %v132
    %vm135 = vcmp.ne.s32.totalorder %v134, 0
    %vm136 = vcmp.lt.s32.totalorder %v134, 0
    %vm137 = vmand %vm136, %vm135
    %v138 = vadd.s32 %v134, 16
    %v139 = vsel %vm137, %v138, %v134
    %vm140 = vcmp.lt.s32.totalorder %v139, 12
    %v141 = vsel %vm140, 1, 0
    %vm142 = vcmp.eq.s32.totalorder %v141, 1
    %v145 = vrot.slane %v124, 2
    %v146 = vrot.slane %v125, 2
    %v147 = vsel %vm84, %v145, %v146
    %148 = vrot.lane.b32.xlu0 %v147, 126
    %v149 = vpop.permute.xlu0 %148
    %150 = vrot.lane.b32.xlu0 %v146, 126
    %v151 = vpop.permute.xlu0 %150
    %v154 = vsel %vm142, %v149, 0.0
    %v155 = vsel %vm142, %v151, 0.0
    %v156 = vadd.f32 %v154, 0.0
    %v157 = vadd.f32 %v155, 0.0
    %vm158 = vcmask 228352
    %v159 = vsel %vm158, %v156, 0.0
    %vm160 = vcmask 224256
    %v161 = vsel %vm160, %v157, 0.0
    %v162 = vadd.f32 %v159, %v161
    %v163 = vrot.slane %v162, 4
    %v164 = vadd.f32 %v162, %v163
    %v165 = vrot.slane %v164, 2
    %v166 = vadd.f32 %v164, %v165
    %v167 = vrot.slane %v166, 1
    %v168 = vadd.f32 %v166, %v167
    %vm169 = vcmask 221184
    %170 = vst.msk [vmem:[#allocation5] sm:$0x1] %vm169, %v168
    // Predicated region
    $region10: #{tpu_custom_call.1} parent=1 // pred_check
      _
    $region11: #{tpu_custom_call.1} parent=1 // pred_check_branch
      %172 = sbr.rel (0) target = $region13
    $region12: #{tpu_custom_call.1} parent=1 // pred_region
      %s174 = ssub.s32 16, 16
      %175 = vsyncadd [#allocation4], %s174
      %s177 = sshll.u32 [#allocation5], 4
      %s178 = int_to_ptr.vmem [resolvable:$true] %s177
      %180 = dma.vmem_to_hbm [thread:$0]  %s178, 16, %s1, [#allocation4]
    $region13: #{tpu_custom_call.1} parent=1 // pred_fallthru
      _
    // Predicated region
    $region14: #{tpu_custom_call.1} parent=1 // pred_check
      _
    $region15: #{tpu_custom_call.1} parent=1 // pred_check_branch
      %182 = sbr.rel (0) target = $region17
    $region16: #{tpu_custom_call.1} parent=1 // pred_region
      %183 = dma.done [#allocation4], 16
    $region17: #{tpu_custom_call.1} parent=1 // pred_fallthru
      _
    %184 = vsyncpa [#allocation3], 1
    %185 = vsyncpa [#allocation4], 1

</llo_original>
